<compile_context>
chip_gen: v7x
topology: tpu7x:2x2x1
jax: 0.10.0
libtpu: 0.0.40
codegen_flags: <defaults>
</compile_context>

<pallas_src>
import jax
import jax.numpy as jnp
from jax.experimental import pallas as pl
from jax.experimental.pallas import tpu as pltpu

_VMEM_LIMIT = 48 * 1024 * 1024  # headroom above scoped defaults, below v7x physical


def _pick_tile(n, candidates):
    """Largest candidate tile that divides n, else n itself (full extent)."""
    for c in candidates:
        if c <= n and n % c == 0:
            return c
    return n


# --------------------------------------------------------------------------- #
# Pass 1: fused QKV projection (one 2-D MXU matmul, M = B*S).
# --------------------------------------------------------------------------- #
def qkv_proj_kernel(x_ref, w_ref, qkv_ref):
    # x_ref: (Tm, Din) bf16   w_ref: (Din, 3*Dp) bf16   qkv_ref: (Tm, 3*Dp) bf16
    qkv_ref[...] = jnp.dot(
        x_ref[...], w_ref[...],
        preferred_element_type=jnp.float32).astype(qkv_ref.dtype)


# --------------------------------------------------------------------------- #
# Pass 2: flash-style causal attention with online softmax.
# --------------------------------------------------------------------------- #
def make_flash_kernel(Tq, Tk):
    def flash_kernel(q_ref, k_ref, v_ref, o_ref, m_sc, l_sc, acc_sc):
        qi = pl.program_id(1)
        ki = pl.program_id(2)
        nk = pl.num_programs(2)

        @pl.when(ki == 0)
        def _init():
            m_sc[...] = jnp.full(m_sc.shape, -jnp.inf, dtype=jnp.float32)
            l_sc[...] = jnp.zeros(l_sc.shape, dtype=jnp.float32)
            acc_sc[...] = jnp.zeros(acc_sc.shape, dtype=jnp.float32)

        # Skip kv tiles that lie entirely above the causal diagonal
        # (kv_start > q_end).
        @pl.when(ki * Tk <= qi * Tq + (Tq - 1))
        def _compute():
            q = q_ref[...]                       # (Bt, Tq, Dp) bf16, scale folded in
            k = k_ref[...]                       # (Bt, Tk, Dp) bf16
            # QK^T: contract last dims directly (no XLU transpose), f32 accum.
            s = jax.lax.dot_general(
                q, k,
                dimension_numbers=(((2,), (2,)), ((0,), (0,))),
                preferred_element_type=jnp.float32)          # (Bt, Tq, Tk) f32

            # Causal mask within the tile (global row/col indices).
            row = qi * Tq + jax.lax.broadcasted_iota(jnp.int32, (Tq, Tk), 0)
            col = ki * Tk + jax.lax.broadcasted_iota(jnp.int32, (Tq, Tk), 1)
            s = jnp.where((col > row)[None], -jnp.inf, s)

            # Online softmax update (all stats in f32).
            m_prev = m_sc[...]
            m_new = jnp.maximum(m_prev, jnp.max(s, axis=-1, keepdims=True))
            alpha = jnp.exp(m_prev - m_new)
            p = jnp.exp(s - m_new)
            l_sc[...] = alpha * l_sc[...] + jnp.sum(p, axis=-1, keepdims=True)
            pv = jax.lax.dot_general(
                p.astype(v_ref.dtype), v_ref[...],
                dimension_numbers=(((2,), (1,)), ((0,), (0,))),
                preferred_element_type=jnp.float32)          # (Bt, Tq, Dp) f32
            acc_sc[...] = alpha * acc_sc[...] + pv
            m_sc[...] = m_new

        @pl.when(ki == nk - 1)
        def _finalize():
            # Deferred softmax normalization.  Exact division (denominator is
            # only (Bt, Tq, 1)); dropout(p=0.0) is identity.
            o_ref[...] = (acc_sc[...] / l_sc[...]).astype(o_ref.dtype)

    return flash_kernel


# --------------------------------------------------------------------------- #
# Wrapper
# --------------------------------------------------------------------------- #
def make_fused_qkv_weight(wq, wk, wv):
    """Build the fused (Din, 3*Dp) bf16 QKV weight ONCE (hoisted off hot path).

    wq/wk/wv are PyTorch-layout (Dout, Din).  The 1/sqrt(Dout) softmax scale is
    folded into the query columns; columns are zero-padded to Dp = ceil(Dout/128)*128
    so every in-kernel slice / store is lane-dense.
    """
    Dout, _ = wq.shape
    Dp = ((Dout + 127) // 128) * 128
    scale = 1.0 / (float(Dout) ** 0.5)

    def pad_cols(w_t):                       # (Din, Dout) -> (Din, Dp)
        return jnp.pad(w_t, ((0, 0), (0, Dp - Dout)))

    w = jnp.concatenate(
        [pad_cols(wq.T * scale), pad_cols(wk.T), pad_cols(wv.T)], axis=1)
    return w.astype(jnp.bfloat16)


def causal_attention(x, w_fused, dim_out):
    """x: (B, S, Din) f32; w_fused: (Din, 3*Dp) bf16 from make_fused_qkv_weight."""
    B, S, Din = x.shape
    Dp3 = w_fused.shape[1]
    Dp = Dp3 // 3
    assert w_fused.shape[0] == Din

    x_bf16 = x.astype(jnp.bfloat16)

    # ---- Pass 1: fused QKV projection, one 2-D matmul with M = B*S. ----
    M = B * S
    Tm = _pick_tile(M, (512, 256, 128))
    x2 = x_bf16.reshape(M, Din)
    qkv2 = pl.pallas_call(
        qkv_proj_kernel,
        out_shape=jax.ShapeDtypeStruct((M, Dp3), jnp.bfloat16),
        grid_spec=pltpu.PrefetchScalarGridSpec(
            num_scalar_prefetch=0,
            grid=(M // Tm,),
            in_specs=[
                pl.BlockSpec((Tm, Din), lambda i: (i, 0)),
                # Resident weights (constant index_map).
                # TODO(synk): pipeline_mode=pl.Buffered(1) would drop the second
                # weight buffer (v7x VMEM headroom); negligible at Din=32.
                pl.BlockSpec((Din, Dp3), lambda i: (0, 0)),
            ],
            out_specs=pl.BlockSpec((Tm, Dp3), lambda i: (i, 0)),
        ),
        compiler_params=pltpu.CompilerParams(
            dimension_semantics=("parallel",),
            vmem_limit_bytes=_VMEM_LIMIT),
    )(x2, w_fused)
    qkv = qkv2.reshape(B, S, Dp3)

    # ---- Pass 2: flash-style causal attention over (batch, q_tile, kv_tile). ----
    Tq = _pick_tile(S, (256, 128))
    Tk = Tq
    Bt = 1  # batch axis keeps >= 2 parallel grid steps whenever B >= 2 (v7x megacore)

    grid = (B // Bt, S // Tq, S // Tk)
    out_padded = pl.pallas_call(
        make_flash_kernel(Tq, Tk),
        out_shape=jax.ShapeDtypeStruct((B, S, Dp), jnp.float32),
        grid_spec=pltpu.PrefetchScalarGridSpec(
            num_scalar_prefetch=0,
            grid=grid,
            in_specs=[
                pl.BlockSpec((Bt, Tq, Dp), lambda b, qi, ki: (b, qi, 0)),  # q cols
                pl.BlockSpec((Bt, Tk, Dp), lambda b, qi, ki: (b, ki, 1)),  # k cols
                pl.BlockSpec((Bt, Tk, Dp), lambda b, qi, ki: (b, ki, 2)),  # v cols
            ],
            out_specs=pl.BlockSpec((Bt, Tq, Dp), lambda b, qi, ki: (b, qi, 0)),
            scratch_shapes=[
                pltpu.VMEM((Bt, Tq, 1), jnp.float32),   # m (running max)
                pltpu.VMEM((Bt, Tq, 1), jnp.float32),   # l (running denom)
                pltpu.VMEM((Bt, Tq, Dp), jnp.float32),  # acc (unnormalized ctx)
            ],
        ),
        compiler_params=pltpu.CompilerParams(
            dimension_semantics=("parallel", "parallel", "arbitrary"),
            vmem_limit_bytes=_VMEM_LIMIT),
    )(qkv, qkv, qkv)

    # Slice off the lane padding.  At Dout << 128 the padded writeback + this
    # slice is extra HBM traffic vs. a masked-store output.
    # TODO(synk): benchmark unpadded (masked vst) output vs padded+slice for small Dout.
    return out_padded[..., :dim_out]


# --------------------------------------------------------------------------- #
# Pure-JAX f32 reference (mirrors the PyTorch module exactly).
# --------------------------------------------------------------------------- #
def reference(x, wq, wk, wv):
    q = jnp.einsum("bsd,od->bso", x, wq)
    k = jnp.einsum("bsd,od->bso", x, wk)
    v = jnp.einsum("bsd,od->bso", x, wv)
    s = jnp.einsum("bqo,bko->bqk", q, k)
    S = x.shape[1]
    mask = jnp.triu(jnp.ones((S, S), dtype=bool), k=1)
    s = jnp.where(mask[None], -jnp.inf, s)
    w = jax.nn.softmax(s / jnp.sqrt(jnp.float32(wq.shape[0])), axis=-1)
    return jnp.einsum("bqk,bko->bqo", w, v)


if __name__ == "__main__":
    # Module config: dim_in=32, dim_out=32, max_len >= seq, qkv_bias=False, dropout=0.0
    B, S, Din, Dout = 2, 8, 32, 32

    key = jax.random.PRNGKey(0)
    kx, kq, kk, kv = jax.random.split(key, 4)
    x = jax.random.normal(kx, (B, S, Din), dtype=jnp.float32)
    # Deterministic Linear weights, PyTorch shape (dim_out, dim_in), no bias.
    wq = jax.random.normal(kq, (Dout, Din), dtype=jnp.float32) * 0.1
    wk = jax.random.normal(kk, (Dout, Din), dtype=jnp.float32) * 0.1
    wv = jax.random.normal(kv, (Dout, Din), dtype=jnp.float32) * 0.1

    # Weight fusion hoisted out of the call path (build once, reuse every call).
    w_fused = make_fused_qkv_weight(wq, wk, wv)

    out = causal_attention(x, w_fused, dim_out=Dout)
    out = jax.block_until_ready(out)

    ref = reference(x, wq, wk, wv)
    assert out.shape == (B, S, Dout)
    # Tolerance reflects bf16 MXU operands (f32 accumulation / f32 softmax stats).
    assert jnp.allclose(out, ref, atol=3e-2, rtol=3e-2), "mismatch vs reference"

    print("KERNEL_OK")
</pallas_src>

<mosaic_0001>
module attributes {stable_mosaic.version = 11 : i64} {
  func.func @qkv_proj_kernel(%arg0: i32, %arg1: memref<16x32xbf16, #tpu.memory_space<vmem>>, %arg2: memref<32x384xbf16, #tpu.memory_space<vmem>>, %arg3: memref<16x384xbf16, #tpu.memory_space<vmem>>) attributes {dimension_semantics = [#tpu.dimension_semantics<parallel>], iteration_bounds = array<i64: 1>, scalar_prefetch = 0 : i64, scratch_operands = 0 : i64, tpu.core_type = #tpu.core_type<tc>, window_params = [{transform_indices = @transform_0, window_bounds = array<i64: 16, 32>}, {pipeline_mode = #tpu.pipeline_mode<synchronous>, transform_indices = @transform_1, window_bounds = array<i64: 32, 384>}, {transform_indices = @transform_2, window_bounds = array<i64: 16, 384>}]} {
    %c0 = arith.constant 0 : index
    %c0_0 = arith.constant 0 : index
    %0 = vector.load %arg1[%c0, %c0_0] : memref<16x32xbf16, #tpu.memory_space<vmem>>, vector<16x32xbf16>
    %c0_1 = arith.constant 0 : index
    %c0_2 = arith.constant 0 : index
    %1 = vector.load %arg2[%c0_1, %c0_2] : memref<32x384xbf16, #tpu.memory_space<vmem>>, vector<32x384xbf16>
    %cst = arith.constant dense<0.000000e+00> : vector<16x384xf32>
    %2 = tpu.matmul %0, %1, %cst {dimension_numbers = #tpu.dot_dimension_numbers<[1], [0], [0], [1], [0, 0, 1, 1], [], []>} : vector<16x32xbf16>, vector<32x384xbf16>, vector<16x384xf32> -> vector<16x384xf32>
    %3 = arith.truncf %2 : vector<16x384xf32> to vector<16x384xbf16>
    %c0_3 = arith.constant 0 : index
    %c0_4 = arith.constant 0 : index
    %4 = vector.load %arg3[%c0_3, %c0_4] : memref<16x384xbf16, #tpu.memory_space<vmem>>, vector<16x384xbf16>
    tpu.vector_store %arg3[%c0_3, %c0_4], %3 {strides = array<i32>} : memref<16x384xbf16, #tpu.memory_space<vmem>>, vector<16x384xbf16>,
    return
  }
  func.func @transform_0(%arg0: i32) -> (i32, i32) {
    %c0_i32 = arith.constant 0 : i32
    %c0_i32_0 = arith.constant 0 : i32
    return %arg0, %c0_i32 : i32, i32
  }
  func.func @transform_1(%arg0: i32) -> (i32, i32) {
    %c0_i32 = arith.constant 0 : i32
    %c0_i32_0 = arith.constant 0 : i32
    %c0_i32_1 = arith.constant 0 : i32
    return %c0_i32, %c0_i32_0 : i32, i32
  }
  func.func @transform_2(%arg0: i32) -> (i32, i32) {
    %c0_i32 = arith.constant 0 : i32
    %c0_i32_0 = arith.constant 0 : i32
    return %arg0, %c0_i32 : i32, i32
  }
}

</mosaic_0001>

<llo_original>
// kernel: tpu_custom_call.1
$region0: #{tpu_custom_call.1}
  #allocation0 [shape = 'u32[]', space=smem, size = 0x4, offset = 0x4, fixed_abs, tag = 'smem constant byte address 0x4 - core index']
  #allocation1 [shape = 'u32[144,128]{1,0:T(1,128)}', space=vmem, size = 0x12000, scoped, tag = 'internal scratch']
  %s0 = inlined_call_operand.hbm [shape: bf16[16,32], index: 0, kind: input, shape index: {}]
  %s1 = inlined_call_operand.hbm [shape: bf16[32,384], index: 1, kind: input, shape index: {}]
  %s2 = inlined_call_operand.hbm [shape: bf16[16,384], index: 2, kind: output, shape index: {}]
  %s3 = sld [smem:[#allocation0]]
  $region26: #{tpu_custom_call.1} parent=0
    _
  %s5 = ssub.s32 1, %s3
  %s6 = scalar_select 0, %s5, %s3
  $region1: #{tpu_custom_call.1} parent=0
    #allocation2 [shape = 'u8[4096]{0}', space=vmem, size = 0x1000, scoped, tag = 'input window, operand 0, single buffered']
    #allocation3 [shape = 's32[1]{0}', space=sflag, size = 0x4, scoped, tag = 'scoped memory for tpu_custom_call.1']
    #allocation4 [shape = 's32[1]{0}', space=sflag, size = 0x4, scoped, tag = 'scoped memory for tpu_custom_call.1']
    #allocation5 [shape = 'u8[24576]{0}', space=vmem, size = 0x6000, scoped, tag = 'input window, operand 1, single buffered']
    #allocation6 [shape = 's32[1]{0}', space=sflag, size = 0x4, scoped, tag = 'scoped memory for tpu_custom_call.1']
    #allocation7 [shape = 'u8[12288]{0}', space=vmem, size = 0x3000, scoped, tag = 'output window, operand 0, single buffered']
    %7 = vsyncpa [#allocation3], 0
    %8 = vsyncpa [#allocation6], 0
    %9 = vsyncpa [#allocation4], 0
    // Predicated region
    $region2: #{tpu_custom_call.1} parent=1 // pred_check
      _
    $region3: #{tpu_custom_call.1} parent=1 // pred_check_branch
      %11 = sbr.rel (0) target = $region5
    $region4: #{tpu_custom_call.1} parent=1 // pred_region
      %s13 = ssub.s32 128, 128
      %14 = vsyncadd [#allocation3], %s13
      %s15 = sshll.u32 [#allocation2], 4
      %s16 = int_to_ptr.vmem [resolvable:$true] %s15
      %21 = dma.hbm_to_vmem [thread:$0]  %s0, 128, %s16, [#allocation3], 64, 64, 4
    $region5: #{tpu_custom_call.1} parent=1 // pred_fallthru
      _
    // Predicated region
    $region6: #{tpu_custom_call.1} parent=1 // pred_check
      _
    $region7: #{tpu_custom_call.1} parent=1 // pred_check_branch
      %23 = sbr.rel (0) target = $region9
    $region8: #{tpu_custom_call.1} parent=1 // pred_region
      %s25 = ssub.s32 768, 768
      %26 = vsyncadd [#allocation6], %s25
      %s27 = sshll.u32 [#allocation5], 4
      %s28 = int_to_ptr.vmem [resolvable:$true] %s27
      %33 = dma.hbm_to_vmem [thread:$0]  %s1, 768, %s28, [#allocation6], 192, 192, 12
    $region9: #{tpu_custom_call.1} parent=1 // pred_fallthru
      _
    // Predicated region
    $region10: #{tpu_custom_call.1} parent=1 // pred_check
      _
    $region11: #{tpu_custom_call.1} parent=1 // pred_check_branch
      %35 = sbr.rel (0) target = $region13
    $region12: #{tpu_custom_call.1} parent=1 // pred_region
      %36 = dma.done [#allocation3], 128
    $region13: #{tpu_custom_call.1} parent=1 // pred_fallthru
      _
    // Predicated region
    $region14: #{tpu_custom_call.1} parent=1 // pred_check
      _
    $region15: #{tpu_custom_call.1} parent=1 // pred_check_branch
      %38 = sbr.rel (0) target = $region17
    $region16: #{tpu_custom_call.1} parent=1 // pred_region
      %39 = dma.done [#allocation6], 768
    $region17: #{tpu_custom_call.1} parent=1 // pred_fallthru
      _
    %v41 = vld [vmem:[#allocation2] sm:$0xf]
    %v42 = vld [vmem:[#allocation2 + $0x4] sm:$0xf]
    %v43 = vld [vmem:[#allocation5] sm:$0xff]
    %v44 = vld [vmem:[#allocation5 + $0x8] sm:$0xf]
    %v45 = vld [vmem:[#allocation5 + $0xc] sm:$0xff]
    %v46 = vld [vmem:[#allocation5 + $0x14] sm:$0xf]
    %v47 = vld [vmem:[#allocation5 + $0x18] sm:$0xff]
    %v48 = vld [vmem:[#allocation5 + $0x20] sm:$0xf]
    %v49 = vld [vmem:[#allocation5 + $0x24] sm:$0xff]
    %v50 = vld [vmem:[#allocation5 + $0x2c] sm:$0xf]
    %v53 = vunpack.c.l.b16 %v41
    %v54 = vunpack.c.l.b16 %v42
    %v55 = vpack.c.b16 %v54, %v53
    %v64 = vunpack.c.l.b16 %v43
    %v65 = vunpack.c.h.b16 %v43
    %v66 = vunpack.c.l.b16 %v44
    %v67 = vunpack.c.l.b16 %v45
    %v68 = vunpack.c.h.b16 %v45
    %v69 = vunpack.c.l.b16 %v46
    %v70 = vunpack.c.l.b16 %v47
    %v71 = vunpack.c.h.b16 %v47
    %v72 = vunpack.c.l.b16 %v48
    %v73 = vunpack.c.l.b16 %v49
    %v74 = vunpack.c.h.b16 %v49
    %v75 = vunpack.c.l.b16 %v50
    %v76 = vpack.c.b16 %v67, %v64
    %v77 = vpack.c.b16 %v68, %v65
    %v78 = vpack.c.b16 %v69, %v66
    %v79 = vpack.c.b16 %v73, %v70
    %v80 = vpack.c.b16 %v74, %v71
    %v81 = vpack.c.b16 %v75, %v72
    %vm88 = vcmask 261120
    %v90 = vsel %vm88, %v55, 0
    %92 = vmatprep.subr.bf16.mxu0 %v77
    %93 = vmatpush1.bf16.msra.mxu0 %v76
    %94 = vmatprep.subr.bf16.mxu0 %v80
    %95 = vmatpush1.bf16.msra.mxu0 %v79
    %96 = vmatprep.subr.bf16.mxu0 0
    %97 = vmatpush1.bf16.msra.mxu0 0
    %98 = vmatprep.subr.bf16.mxu0 0
    %99 = vmatpush1.bf16.msra.mxu0 0
    %100 = vmatprep.subr.bf16.mxu0 0
    %101 = vmatpush1.bf16.msra.mxu0 0
    %102 = vmatprep.subr.bf16.mxu0 0
    %103 = vmatpush1.bf16.msra.mxu0 0
    %104 = vmatprep.subr.bf16.mxu0 0
    %105 = vmatpush1.bf16.msra.mxu0 0
    %106 = vmatprep.subr.bf16.mxu0 0
    %107 = vmatpush1.bf16.msra.mxu0 0
    %108 = vmatprep.subr.bf16.mxu0 0
    %109 = vmatpush1.bf16.msra.mxu0 0
    %110 = vmatprep.subr.bf16.mxu0 0
    %111 = vmatpush1.bf16.msra.mxu0 0
    %112 = vmatprep.subr.bf16.mxu0 0
    %113 = vmatpush1.bf16.msra.mxu0 0
    %114 = vmatprep.subr.bf16.mxu0 0
    %115 = vmatpush1.bf16.msra.mxu0 0
    %116 = vmatprep.subr.bf16.mxu0 0
    %117 = vmatpush1.bf16.msra.mxu0 0
    %118 = vmatprep.subr.bf16.mxu0 0
    %119 = vmatpush1.bf16.msra.mxu0 0
    %120 = vmatprep.subr.bf16.mxu0 0
    %121 = vmatpush1.bf16.msra.mxu0 0
    %122 = vmatprep.subr.bf16.mxu0 0
    %123 = vmatpush1.bf16.msra.mxu0 0
    %124 = vmatprep.mubr.bf16.mxu0 0
    %125 = vmatmul.mubr.bf16.gmra.mrb[0].mxu0 %v90
    %v126 = vpop.f32.mrb[0].mxu0
    %v127 = vadd.f32 0.0, %v126
    %v128 = vpop.f32.mrb[0].mxu0
    %v129 = vadd.f32 0.0, %v128
    %v130 = vpop.f32.mrb[0].mxu0
    %v131 = vadd.f32 0.0, %v130
    %v132 = vpop.f32.mrb[0].mxu0
    %v133 = vadd.f32 0.0, %v132
    %134 = vdwg.mxu0
    %135 = vmatprep.subr.bf16.mxu0 0
    %136 = vmatpush1.bf16.msra.mxu0 %v78
    %137 = vmatprep.subr.bf16.mxu0 0
    %138 = vmatpush1.bf16.msra.mxu0 %v81
    %139 = vmatprep.subr.bf16.mxu0 0
    %140 = vmatpush1.bf16.msra.mxu0 0
    %141 = vmatprep.subr.bf16.mxu0 0
    %142 = vmatpush1.bf16.msra.mxu0 0
    %143 = vmatprep.subr.bf16.mxu0 0
    %144 = vmatpush1.bf16.msra.mxu0 0
    %145 = vmatprep.subr.bf16.mxu0 0
    %146 = vmatpush1.bf16.msra.mxu0 0
    %147 = vmatprep.subr.bf16.mxu0 0
    %148 = vmatpush1.bf16.msra.mxu0 0
    %149 = vmatprep.subr.bf16.mxu0 0
    %150 = vmatpush1.bf16.msra.mxu0 0
    %151 = vmatprep.subr.bf16.mxu0 0
    %152 = vmatpush1.bf16.msra.mxu0 0
    %153 = vmatprep.subr.bf16.mxu0 0
    %154 = vmatpush1.bf16.msra.mxu0 0
    %155 = vmatprep.subr.bf16.mxu0 0
    %156 = vmatpush1.bf16.msra.mxu0 0
    %157 = vmatprep.subr.bf16.mxu0 0
    %158 = vmatpush1.bf16.msra.mxu0 0
    %159 = vmatprep.subr.bf16.mxu0 0
    %160 = vmatpush1.bf16.msra.mxu0 0
    %161 = vmatprep.subr.bf16.mxu0 0
    %162 = vmatpush1.bf16.msra.mxu0 0
    %163 = vmatprep.subr.bf16.mxu0 0
    %164 = vmatpush1.bf16.msra.mxu0 0
    %165 = vmatprep.subr.bf16.mxu0 0
    %166 = vmatpush1.bf16.msra.mxu0 0
    %167 = vmatprep.mubr.bf16.mxu0 0
    %168 = vmatmul.mubr.bf16.gmra.mrb[0].mxu0 %v90
    %v169 = vpop.f32.mrb[0].mxu0
    %v170 = vadd.f32 0.0, %v169
    %v171 = vpop.f32.mrb[0].mxu0
    %v172 = vpop.f32.mrb[0].mxu0
    %v173 = vadd.f32 0.0, %v172
    %v174 = vpop.f32.mrb[0].mxu0
    %175 = vdwg.mxu0
    %v176 = vpack.c.bf16 %v131, %v127
    %v177 = vpack.c.bf16 %v133, %v129
    %v178 = vpack.c.bf16 %v173, %v170
    %v182 = vunpack.c.l.b16 %v176
    %v183 = vunpack.c.l.b16 %v177
    %v184 = vunpack.c.l.b16 %v178
    %v185 = vunpack.c.h.b16 %v176
    %v186 = vunpack.c.h.b16 %v177
    %v187 = vunpack.c.h.b16 %v178
    %v188 = vpack.c.b16 %v183, %v182
    %v189 = vpack.c.b16 %v184, %v184
    %v190 = vpack.c.b16 %v186, %v185
    %v191 = vpack.c.b16 %v187, %v187
    %196 = vst [vmem:[#allocation7] sm:$0xff] %v188
    %197 = vst [vmem:[#allocation7 + $0x8] sm:$0xf] %v189
    %198 = vst [vmem:[#allocation7 + $0xc] sm:$0xff] %v190
    %199 = vst [vmem:[#allocation7 + $0x14] sm:$0xf] %v191
    // Predicated region
    $region18: #{tpu_custom_call.1} parent=1 // pred_check
      _
    $region19: #{tpu_custom_call.1} parent=1 // pred_check_branch
      %201 = sbr.rel (0) target = $region21
    $region20: #{tpu_custom_call.1} parent=1 // pred_region
      %s203 = ssub.s32 384, 384
      %204 = vsyncadd [#allocation4], %s203
      %s205 = sshll.u32 [#allocation7], 4
      %s206 = int_to_ptr.vmem [resolvable:$true] %s205
      %211 = dma.vmem_to_hbm [thread:$0]  %s206, 384, %s2, [#allocation4], 192, 192, 12
    $region21: #{tpu_custom_call.1} parent=1 // pred_fallthru
      _
    // Predicated region
    $region22: #{tpu_custom_call.1} parent=1 // pred_check
      _
    $region23: #{tpu_custom_call.1} parent=1 // pred_check_branch
      %213 = sbr.rel (0) target = $region25
    $region24: #{tpu_custom_call.1} parent=1 // pred_region
      %214 = dma.done [#allocation4], 384
    $region25: #{tpu_custom_call.1} parent=1 // pred_fallthru
      _
    %215 = vsyncpa [#allocation3], 1
    %216 = vsyncpa [#allocation6], 1
    %217 = vsyncpa [#allocation4], 1

</llo_original>
